<compile_context>
chip_gen: v5e
topology: v5e:2x2
jax: 0.10.0
libtpu: 0.0.40
codegen_flags: <defaults>
</compile_context>

<pallas_src>
import functools

import jax
import jax.numpy as jnp
import numpy as np
from jax.experimental import pallas as pl
from jax.experimental.pallas import tpu as pltpu


def _round_up(x, m):
    return (x + m - 1) // m * m


def _fused_mlp_kernel(alpha_ref, x_ref, *refs, n_layers, last_relu):
    """All MLP layers fused for one row tile.

    refs = (w_0, shift_0, w_1, shift_1, ..., o_ref)
      w_l     : (Dp_in_l, Dp_out_l) bf16, BN scale folded in
      shift_l : (1, Dp_out_l)       f32, (bias - mean)*scale + beta
    alpha_ref : (n_layers,) f32 in SMEM (PReLU slopes, num_parameters=1)
    """
    o_ref = refs[-1]
    layer_refs = refs[:-1]

    cur = x_ref[...]                      # (tm, Dp_in0) bf16
    y = None
    for li in range(n_layers):
        w = layer_refs[2 * li][...]       # (Dp_in, Dp_out) bf16
        shift = layer_refs[2 * li + 1][...]  # (1, Dp_out)  f32
        y = jnp.dot(cur, w, preferred_element_type=jnp.float32)
        y = y + shift                     # folded bias + BN affine
        if li < n_layers - 1 or last_relu:
            a = alpha_ref[li]             # scalar PReLU slope from SMEM
            y = jnp.where(y >= 0.0, y, a * y)
        if li < n_layers - 1:
            cur = y.astype(jnp.bfloat16)  # keep matmul inputs bf16
    o_ref[...] = y.astype(o_ref.dtype)


def init_mlp_params(key, in_channel, channels):
    """Deterministic parameters matching torch default inits (eval-mode BN)."""
    params = []
    d_prev = in_channel
    for d_out in channels:
        key, kw, kb = jax.random.split(key, 3)
        bound = 1.0 / jnp.sqrt(jnp.float32(d_prev))
        w = jax.random.uniform(kw, (d_prev, d_out), jnp.float32, -bound, bound)
        b = jax.random.uniform(kb, (d_out,), jnp.float32, -bound, bound)
        params.append(dict(
            w=w, b=b,
            gamma=jnp.ones((d_out,), jnp.float32),
            beta=jnp.zeros((d_out,), jnp.float32),
            mean=jnp.zeros((d_out,), jnp.float32),
            var=jnp.ones((d_out,), jnp.float32),
            alpha=jnp.full((1, 1), 0.25, jnp.float32),   # PReLU default slope
        ))
        d_prev = d_out
    return params


def mlp_forward(feature, params, lastReLU=False, eps=1e-5, tm=512):
    """feature: [B, S, D_in] -> [B, S, channels[-1]] (matches MLP.forward)."""
    B, S, D_in = feature.shape
    M = B * S
    n_layers = len(params)

    # ---- Host-side folding & padding -------------------------------------
    # BN(xW + b) = x (W * scale) + (b - mean) * scale + beta,
    #   scale = gamma / sqrt(var + eps)
    d_in_p = _round_up(D_in, 8)           # sublane-friendly input width
    folded = []
    alphas = []
    d_prev, d_prev_p = D_in, d_in_p
    for p in params:
        d_out = p["w"].shape[1]
        d_out_p = _round_up(d_out, 128)   # lane-dense channel widths
        scale = p["gamma"] / jnp.sqrt(p["var"] + eps)
        w = p["w"] * scale[None, :]
        shift = (p["b"] - p["mean"]) * scale + p["beta"]
        w_p = jnp.zeros((d_prev_p, d_out_p), jnp.float32)
        w_p = w_p.at[:d_prev, :d_out].set(w)
        s_p = jnp.zeros((1, d_out_p), jnp.float32).at[0, :d_out].set(shift)
        folded.append((w_p.astype(jnp.bfloat16), s_p))
        alphas.append(p["alpha"].reshape(()).astype(jnp.float32))
        d_prev, d_prev_p = d_out, d_out_p
    d_out_last = params[-1]["w"].shape[1]
    d_out_last_p = d_prev_p
    alphas = jnp.stack(alphas)            # (n_layers,) f32 -> SMEM

    # ---- Row tiling: big MXU-friendly tile, pad rows to a full grid -------
    tm_eff = min(tm, _round_up(M, 128))
    Mp = _round_up(M, tm_eff)
    x2d = feature.reshape(M, D_in).astype(jnp.bfloat16)
    if Mp != M or d_in_p != D_in:
        x2d = jnp.pad(x2d, ((0, Mp - M), (0, d_in_p - D_in)))

    # ---- Specs -------------------------------------------------------------
    in_specs = [pl.BlockSpec(memory_space=pltpu.MemorySpace.SMEM)]     # alphas
    in_specs.append(pl.BlockSpec((tm_eff, d_in_p), lambda i: (i, 0)))  # x tile
    flat_params = []
    for (w_p, s_p) in folded:
        in_specs.append(pl.BlockSpec(w_p.shape, lambda i: (0, 0)))
        in_specs.append(pl.BlockSpec(s_p.shape, lambda i: (0, 0)))
        flat_params += [w_p, s_p]
    out_spec = pl.BlockSpec((tm_eff, d_out_last_p), lambda i: (i, 0))

    # ---- VMEM budget (sized for v7x's 64 MiB; double-buffered IO tiles,
    # resident weights, intermediate activations) ----------------------------
    est = 2 * tm_eff * d_in_p * 2 + 2 * tm_eff * d_out_last_p * 4
    for (w_p, s_p) in folded:
        est += 2 * (w_p.size * 2 + s_p.size * 4)
        est += tm_eff * w_p.shape[1] * 4
    vmem_limit = int(min(max(4 * est, 16 * 2**20), 48 * 2**20))

    kernel = functools.partial(_fused_mlp_kernel,
                               n_layers=n_layers, last_relu=lastReLU)
    out_p = pl.pallas_call(
        kernel,
        out_shape=jax.ShapeDtypeStruct((Mp, d_out_last_p), jnp.float32),
        grid=(Mp // tm_eff,),
        in_specs=in_specs,
        out_specs=out_spec,
        compiler_params=pltpu.CompilerParams(
            dimension_semantics=("parallel",),
            vmem_limit_bytes=vmem_limit,
        ),
    )(alphas, x2d, *flat_params)

    # TODO(synk): training-mode BatchNorm (batch statistics) and Dropout are
    # not implemented; module defaults (eval BN, dropout=None) are exact.
    return out_p[:M, :d_out_last].reshape(B, S, d_out_last)


def _reference_forward(feature, params, lastReLU=False, eps=1e-5):
    """Pure-JAX f32 reference of the same forward pass (for a sanity check)."""
    B, S, _ = feature.shape
    x = feature.reshape(B * S, -1)
    n_layers = len(params)
    for li, p in enumerate(params):
        scale = p["gamma"] / jnp.sqrt(p["var"] + eps)
        y = x @ p["w"] + p["b"]
        y = y * scale + (p["beta"] - p["mean"] * scale)
        if li < n_layers - 1 or lastReLU:
            a = p["alpha"].reshape(())
            y = jnp.where(y >= 0.0, y, a * y)
        x = y
    return x.reshape(B, S, -1)


if __name__ == "__main__":
    key = jax.random.PRNGKey(0)
    B, S, D_in = 2, 8, 4
    channels = [32, 16]

    key, kf = jax.random.split(key)
    feature = jax.random.normal(kf, (B, S, D_in), jnp.float32)
    params = init_mlp_params(key, D_in, channels)

    out = mlp_forward(feature, params)
    out = jax.block_until_ready(out)
    assert out.shape == (B, S, channels[-1]), out.shape

    ref = _reference_forward(feature, params)
    np.testing.assert_allclose(np.asarray(out), np.asarray(ref),
                               rtol=5e-2, atol=5e-2)
    print("KERNEL_OK")
</pallas_src>

<mosaic_0001>
module attributes {stable_mosaic.version = 11 : i64} {
  func.func @_fused_mlp_kernel(%arg0: i32, %arg1: memref<2xf32, #tpu.memory_space<smem>>, %arg2: memref<128x8xbf16, #tpu.memory_space<vmem>>, %arg3: memref<8x128xbf16, #tpu.memory_space<vmem>>, %arg4: memref<1x128xf32, #tpu.memory_space<vmem>>, %arg5: memref<128x128xbf16, #tpu.memory_space<vmem>>, %arg6: memref<1x128xf32, #tpu.memory_space<vmem>>, %arg7: memref<128x128xf32, #tpu.memory_space<vmem>>) attributes {dimension_semantics = [#tpu.dimension_semantics<parallel>], iteration_bounds = array<i64: 1>, scalar_prefetch = 0 : i64, scratch_operands = 0 : i64, tpu.core_type = #tpu.core_type<tc>, window_params = [{transform_indices = @transform_0, window_bounds = array<i64: 2>}, {transform_indices = @transform_1, window_bounds = array<i64: 128, 8>}, {pipeline_mode = #tpu.pipeline_mode<synchronous>, transform_indices = @transform_2, window_bounds = array<i64: 8, 128>}, {pipeline_mode = #tpu.pipeline_mode<synchronous>, transform_indices = @transform_3, window_bounds = array<i64: 1, 128>}, {pipeline_mode = #tpu.pipeline_mode<synchronous>, transform_indices = @transform_4, window_bounds = array<i64: 128, 128>}, {pipeline_mode = #tpu.pipeline_mode<synchronous>, transform_indices = @transform_5, window_bounds = array<i64: 1, 128>}, {transform_indices = @transform_6, window_bounds = array<i64: 128, 128>}]} {
    %c0 = arith.constant 0 : index
    %c0_0 = arith.constant 0 : index
    %0 = vector.load %arg2[%c0, %c0_0] : memref<128x8xbf16, #tpu.memory_space<vmem>>, vector<128x8xbf16>
    %c0_1 = arith.constant 0 : index
    %c0_2 = arith.constant 0 : index
    %1 = vector.load %arg3[%c0_1, %c0_2] : memref<8x128xbf16, #tpu.memory_space<vmem>>, vector<8x128xbf16>
    %c0_3 = arith.constant 0 : index
    %c0_4 = arith.constant 0 : index
    %2 = vector.load %arg4[%c0_3, %c0_4] : memref<1x128xf32, #tpu.memory_space<vmem>>, vector<1x128xf32>
    %cst = arith.constant dense<0.000000e+00> : vector<128x128xf32>
    %3 = tpu.matmul %0, %1, %cst {dimension_numbers = #tpu.dot_dimension_numbers<[1], [0], [0], [1], [0, 0, 1, 1], [], []>} : vector<128x8xbf16>, vector<8x128xbf16>, vector<128x128xf32> -> vector<128x128xf32>
    %4 = vector.broadcast %2 : vector<1x128xf32> to vector<128x128xf32>
    %5 = arith.addf %3, %4 : vector<128x128xf32>
    %c0_5 = arith.constant 0 : index
    %6 = memref.load %arg1[%c0_5] : memref<2xf32, #tpu.memory_space<smem>>
    %cst_6 = arith.constant 0.000000e+00 : f32
    %7 = vector.broadcast %cst_6 : f32 to vector<128x128xf32>
    %8 = arith.cmpf oge, %5, %7 : vector<128x128xf32>
    %9 = vector.broadcast %6 : f32 to vector<128x128xf32>
    %10 = arith.mulf %9, %5 : vector<128x128xf32>
    %11 = arith.select %8, %5, %10 : vector<128x128xi1>, vector<128x128xf32>
    %12 = arith.truncf %11 : vector<128x128xf32> to vector<128x128xbf16>
    %c0_7 = arith.constant 0 : index
    %c0_8 = arith.constant 0 : index
    %13 = vector.load %arg5[%c0_7, %c0_8] : memref<128x128xbf16, #tpu.memory_space<vmem>>, vector<128x128xbf16>
    %c0_9 = arith.constant 0 : index
    %c0_10 = arith.constant 0 : index
    %14 = vector.load %arg6[%c0_9, %c0_10] : memref<1x128xf32, #tpu.memory_space<vmem>>, vector<1x128xf32>
    %cst_11 = arith.constant dense<0.000000e+00> : vector<128x128xf32>
    %15 = tpu.matmul %12, %13, %cst_11 {dimension_numbers = #tpu.dot_dimension_numbers<[1], [0], [0], [1], [0, 0, 1, 1], [], []>} : vector<128x128xbf16>, vector<128x128xbf16>, vector<128x128xf32> -> vector<128x128xf32>
    %16 = vector.broadcast %14 : vector<1x128xf32> to vector<128x128xf32>
    %17 = arith.addf %15, %16 : vector<128x128xf32>
    %c0_12 = arith.constant 0 : index
    %c0_13 = arith.constant 0 : index
    %18 = vector.load %arg7[%c0_12, %c0_13] : memref<128x128xf32, #tpu.memory_space<vmem>>, vector<128x128xf32>
    tpu.vector_store %arg7[%c0_12, %c0_13], %17 {strides = array<i32>} : memref<128x128xf32, #tpu.memory_space<vmem>>, vector<128x128xf32>,
    return
  }
  func.func @transform_0(%arg0: i32) -> i32 {
    %c0_i32 = arith.constant 0 : i32
    %c0_i32_0 = arith.constant 0 : i32
    return %c0_i32 : i32
  }
  func.func @transform_1(%arg0: i32) -> (i32, i32) {
    %c0_i32 = arith.constant 0 : i32
    %c0_i32_0 = arith.constant 0 : i32
    return %arg0, %c0_i32 : i32, i32
  }
  func.func @transform_2(%arg0: i32) -> (i32, i32) {
    %c0_i32 = arith.constant 0 : i32
    %c0_i32_0 = arith.constant 0 : i32
    %c0_i32_1 = arith.constant 0 : i32
    return %c0_i32, %c0_i32_0 : i32, i32
  }
  func.func @transform_3(%arg0: i32) -> (i32, i32) {
    %c0_i32 = arith.constant 0 : i32
    %c0_i32_0 = arith.constant 0 : i32
    %c0_i32_1 = arith.constant 0 : i32
    return %c0_i32, %c0_i32_0 : i32, i32
  }
  func.func @transform_4(%arg0: i32) -> (i32, i32) {
    %c0_i32 = arith.constant 0 : i32
    %c0_i32_0 = arith.constant 0 : i32
    %c0_i32_1 = arith.constant 0 : i32
    return %c0_i32, %c0_i32_0 : i32, i32
  }
  func.func @transform_5(%arg0: i32) -> (i32, i32) {
    %c0_i32 = arith.constant 0 : i32
    %c0_i32_0 = arith.constant 0 : i32
    %c0_i32_1 = arith.constant 0 : i32
    return %c0_i32, %c0_i32_0 : i32, i32
  }
  func.func @transform_6(%arg0: i32) -> (i32, i32) {
    %c0_i32 = arith.constant 0 : i32
    %c0_i32_0 = arith.constant 0 : i32
    return %arg0, %c0_i32 : i32, i32
  }
}

</mosaic_0001>

<llo_original>
// kernel: tpu_custom_call.1
$region0: #{tpu_custom_call.1}
  #allocation0 [shape = 'u32[]', space=smem, size = 0x4, offset = 0x4, fixed_abs, tag = 'smem constant byte address 0x4 - core index']
  #allocation1 [shape = 'u32[72,128]{1,0:T(1,128)}', space=vmem, size = 0x9000, scoped, tag = 'internal scratch']
  %s0 = inlined_call_operand.vmem [shape: f32[2], index: 0, kind: input, shape index: {}]
  %s1 = inlined_call_operand.vmem [shape: bf16[128,8], index: 1, kind: input, shape index: {}]
  %s2 = inlined_call_operand.vmem [shape: bf16[8,128], index: 2, kind: input, shape index: {}]
  %s3 = inlined_call_operand.vmem [shape: f32[1,128], index: 3, kind: input, shape index: {}]
  %s4 = inlined_call_operand.vmem [shape: bf16[128,128], index: 4, kind: input, shape index: {}]
  %s5 = inlined_call_operand.vmem [shape: f32[1,128], index: 5, kind: input, shape index: {}]
  %s6 = inlined_call_operand.hbm [shape: f32[128,128], index: 6, kind: output, shape index: {}]
  %s7 = sld [smem:[#allocation0]]
  $region38: #{tpu_custom_call.1} parent=0
    _
  %s9 = ssub.s32 1, %s7
  %s10 = scalar_select 0, %s9, %s7
  $region1: #{tpu_custom_call.1} parent=0
    #allocation2 [shape = 'u8[512]{0}', space=smem, size = 0x200, scoped, tag = 'input window, operand 0, single buffered']
    #allocation3 [shape = 's32[1]{0}', space=sflag, size = 0x4, scoped, tag = 'scoped memory for tpu_custom_call.1']
    #allocation4 [shape = 's32[1]{0}', space=sflag, size = 0x4, scoped, tag = 'scoped memory for tpu_custom_call.1']
    #allocation5 [shape = 'u8[65536]{0}', space=vmem, size = 0x10000, scoped, tag = 'output window, operand 0, single buffered']
    %11 = vsyncpa [#allocation4], 0
    %12 = vsyncpa [#allocation3], 0
    // Predicated region
    $region2: #{tpu_custom_call.1} parent=1 // pred_check
      _
    $region3: #{tpu_custom_call.1} parent=1 // pred_check_branch
      %14 = sbr.rel (0) target = $region5
    $region4: #{tpu_custom_call.1} parent=1 // pred_region
      %16 = vsyncadd [#allocation4], 0
      %s18 = sshll.u32 %s0, 4
      %s19 = int_to_ptr.vmem [resolvable:$true] %s18
      %21 = dma.vmem_to_smem %s19, 16, [#allocation2], [#allocation4]
    $region5: #{tpu_custom_call.1} parent=1 // pred_fallthru
      _
    // Predicated region
    $region6: #{tpu_custom_call.1} parent=1 // pred_check
      _
    $region7: #{tpu_custom_call.1} parent=1 // pred_check_branch
      %23 = sbr.rel (0) target = $region9
    $region8: #{tpu_custom_call.1} parent=1 // pred_region
      _
    $region9: #{tpu_custom_call.1} parent=1 // pred_fallthru
      _
    // Predicated region
    $region10: #{tpu_custom_call.1} parent=1 // pred_check
      _
    $region11: #{tpu_custom_call.1} parent=1 // pred_check_branch
      %25 = sbr.rel (0) target = $region13
    $region12: #{tpu_custom_call.1} parent=1 // pred_region
      _
    $region13: #{tpu_custom_call.1} parent=1 // pred_fallthru
      _
    // Predicated region
    $region14: #{tpu_custom_call.1} parent=1 // pred_check
      _
    $region15: #{tpu_custom_call.1} parent=1 // pred_check_branch
      %27 = sbr.rel (0) target = $region17
    $region16: #{tpu_custom_call.1} parent=1 // pred_region
      _
    $region17: #{tpu_custom_call.1} parent=1 // pred_fallthru
      _
    // Predicated region
    $region18: #{tpu_custom_call.1} parent=1 // pred_check
      _
    $region19: #{tpu_custom_call.1} parent=1 // pred_check_branch
      %29 = sbr.rel (0) target = $region21
    $region20: #{tpu_custom_call.1} parent=1 // pred_region
      _
    $region21: #{tpu_custom_call.1} parent=1 // pred_fallthru
      _
    // Predicated region
    $region22: #{tpu_custom_call.1} parent=1 // pred_check
      _
    $region23: #{tpu_custom_call.1} parent=1 // pred_check_branch
      %31 = sbr.rel (0) target = $region25
    $region24: #{tpu_custom_call.1} parent=1 // pred_region
      _
    $region25: #{tpu_custom_call.1} parent=1 // pred_fallthru
      _
    // Predicated region
    $region26: #{tpu_custom_call.1} parent=1 // pred_check
      _
    $region27: #{tpu_custom_call.1} parent=1 // pred_check_branch
      %33 = sbr.rel (0) target = $region29
    $region28: #{tpu_custom_call.1} parent=1 // pred_region
      %35 = dma.done [#allocation4], 16
    $region29: #{tpu_custom_call.1} parent=1 // pred_fallthru
      _
    %36 = sfence
    %v38 = vld [vmem:[%s1] sm:$0xf]
    %v39 = vld [vmem:[%s1 + $0x4] sm:$0xf]
    %v40 = vld [vmem:[%s1 + $0x8] sm:$0xf]
    %v41 = vld [vmem:[%s1 + $0xc] sm:$0xf]
    %v42 = vld [vmem:[%s1 + $0x10] sm:$0xf]
    %v43 = vld [vmem:[%s1 + $0x14] sm:$0xf]
    %v44 = vld [vmem:[%s1 + $0x18] sm:$0xf]
    %v45 = vld [vmem:[%s1 + $0x1c] sm:$0xf]
    %v46 = vld [vmem:[%s1 + $0x20] sm:$0xf]
    %v47 = vld [vmem:[%s1 + $0x24] sm:$0xf]
    %v48 = vld [vmem:[%s1 + $0x28] sm:$0xf]
    %v49 = vld [vmem:[%s1 + $0x2c] sm:$0xf]
    %v50 = vld [vmem:[%s1 + $0x30] sm:$0xf]
    %v51 = vld [vmem:[%s1 + $0x34] sm:$0xf]
    %v52 = vld [vmem:[%s1 + $0x38] sm:$0xf]
    %v53 = vld [vmem:[%s1 + $0x3c] sm:$0xf]
    %v54 = vld [vmem:[%s2] sm:$0xf]
    %v55 = vld [vmem:[%s3] sm:$0x1]
    %v57 = vperm.slane %v55, 0
    %v75 = vunpack.c.l.b16 %v38
    %v76 = vunpack.c.l.b16 %v39
    %v77 = vunpack.c.l.b16 %v40
    %v78 = vunpack.c.l.b16 %v41
    %v79 = vunpack.c.l.b16 %v42
    %v80 = vunpack.c.l.b16 %v43
    %v81 = vunpack.c.l.b16 %v44
    %v82 = vunpack.c.l.b16 %v45
    %v83 = vunpack.c.l.b16 %v46
    %v84 = vunpack.c.l.b16 %v47
    %v85 = vunpack.c.l.b16 %v48
    %v86 = vunpack.c.l.b16 %v49
    %v87 = vunpack.c.l.b16 %v50
    %v88 = vunpack.c.l.b16 %v51
    %v89 = vunpack.c.l.b16 %v52
    %v90 = vunpack.c.l.b16 %v53
    %v91 = vpack.c.b16 %v76, %v75
    %v92 = vpack.c.b16 %v78, %v77
    %v93 = vpack.c.b16 %v80, %v79
    %v94 = vpack.c.b16 %v82, %v81
    %v95 = vpack.c.b16 %v84, %v83
    %v96 = vpack.c.b16 %v86, %v85
    %v97 = vpack.c.b16 %v88, %v87
    %v98 = vpack.c.b16 %v90, %v89
    %vm99 = vcmask 64512
    %v101 = vsel %vm99, %v91, 0
    %v104 = vsel %vm99, %v92, 0
    %v107 = vsel %vm99, %v93, 0
    %v110 = vsel %vm99, %v94, 0
    %v113 = vsel %vm99, %v95, 0
    %v116 = vsel %vm99, %v96, 0
    %v119 = vsel %vm99, %v97, 0
    %v122 = vsel %vm99, %v98, 0
    %vm124 = vcmask 1043456
    %v126 = vsel %vm124, %v54, 0
    %128 = vmatpush.bf16.msra.mxu0 0
    %129 = vmatpush.bf16.msra.mxu0 0
    %130 = vmatpush.bf16.msra.mxu0 0
    %131 = vmatpush.bf16.msra.mxu0 0
    %132 = vmatpush.bf16.msra.mxu0 0
    %133 = vmatpush.bf16.msra.mxu0 0
    %134 = vmatpush.bf16.msra.mxu0 0
    %135 = vmatpush.bf16.msra.mxu0 %v126
    %136 = vmatmul.bf16.gmra.mxu0 %v101
    %v137 = vpop.f32.mrf.mxu0
    %v138 = vadd.f32 %v57, %v137
    %v139 = vpop.f32.mrf.mxu0
    %v140 = vadd.f32 %v57, %v139
    %141 = vmatmul.bf16.gmra.mxu0 %v104
    %v142 = vpop.f32.mrf.mxu0
    %v143 = vadd.f32 %v57, %v142
    %v144 = vpop.f32.mrf.mxu0
    %v145 = vadd.f32 %v57, %v144
    %146 = vmatmul.bf16.gmra.mxu0 %v107
    %v147 = vpop.f32.mrf.mxu0
    %v148 = vadd.f32 %v57, %v147
    %v149 = vpop.f32.mrf.mxu0
    %v150 = vadd.f32 %v57, %v149
    %151 = vmatmul.bf16.gmra.mxu0 %v110
    %v152 = vpop.f32.mrf.mxu0
    %v153 = vadd.f32 %v57, %v152
    %v154 = vpop.f32.mrf.mxu0
    %v155 = vadd.f32 %v57, %v154
    %156 = vmatmul.bf16.gmra.mxu0 %v113
    %v157 = vpop.f32.mrf.mxu0
    %v158 = vadd.f32 %v57, %v157
    %v159 = vpop.f32.mrf.mxu0
    %v160 = vadd.f32 %v57, %v159
    %161 = vmatmul.bf16.gmra.mxu0 %v116
    %v162 = vpop.f32.mrf.mxu0
    %v163 = vadd.f32 %v57, %v162
    %v164 = vpop.f32.mrf.mxu0
    %v165 = vadd.f32 %v57, %v164
    %166 = vmatmul.bf16.gmra.mxu0 %v119
    %v167 = vpop.f32.mrf.mxu0
    %v168 = vadd.f32 %v57, %v167
    %v169 = vpop.f32.mrf.mxu0
    %v170 = vadd.f32 %v57, %v169
    %171 = vmatmul.bf16.gmra.mxu0 %v122
    %v172 = vpop.f32.mrf.mxu0
    %v173 = vadd.f32 %v57, %v172
    %v174 = vpop.f32.mrf.mxu0
    %v175 = vadd.f32 %v57, %v174
    %176 = vdwg.mxu0
    %s177 = sld [smem:[#allocation2]]
    %vm178 = vcmp.ge.f32.partialorder %v138, 0.0
    %vm179 = vcmp.ge.f32.partialorder %v140, 0.0
    %vm180 = vcmp.ge.f32.partialorder %v143, 0.0
    %vm181 = vcmp.ge.f32.partialorder %v145, 0.0
    %vm182 = vcmp.ge.f32.partialorder %v148, 0.0
    %vm183 = vcmp.ge.f32.partialorder %v150, 0.0
    %vm184 = vcmp.ge.f32.partialorder %v153, 0.0
    %vm185 = vcmp.ge.f32.partialorder %v155, 0.0
    %vm186 = vcmp.ge.f32.partialorder %v158, 0.0
    %vm187 = vcmp.ge.f32.partialorder %v160, 0.0
    %vm188 = vcmp.ge.f32.partialorder %v163, 0.0
    %vm189 = vcmp.ge.f32.partialorder %v165, 0.0
    %vm190 = vcmp.ge.f32.partialorder %v168, 0.0
    %vm191 = vcmp.ge.f32.partialorder %v170, 0.0
    %vm192 = vcmp.ge.f32.partialorder %v173, 0.0
    %vm193 = vcmp.ge.f32.partialorder %v175, 0.0
    %v194 = vstv %s177
    %v195 = vmul.f32 %v194, %v138
    %v196 = vmul.f32 %v194, %v140
    %v197 = vmul.f32 %v194, %v143
    %v198 = vmul.f32 %v194, %v145
    %v199 = vmul.f32 %v194, %v148
    %v200 = vmul.f32 %v194, %v150
    %v201 = vmul.f32 %v194, %v153
    %v202 = vmul.f32 %v194, %v155
    %v203 = vmul.f32 %v194, %v158
    %v204 = vmul.f32 %v194, %v160
    %v205 = vmul.f32 %v194, %v163
    %v206 = vmul.f32 %v194, %v165
    %v207 = vmul.f32 %v194, %v168
    %v208 = vmul.f32 %v194, %v170
    %v209 = vmul.f32 %v194, %v173
    %v210 = vmul.f32 %v194, %v175
    %v211 = vsel %vm178, %v138, %v195
    %v212 = vsel %vm179, %v140, %v196
    %v213 = vsel %vm180, %v143, %v197
    %v214 = vsel %vm181, %v145, %v198
    %v215 = vsel %vm182, %v148, %v199
    %v216 = vsel %vm183, %v150, %v200
    %v217 = vsel %vm184, %v153, %v201
    %v218 = vsel %vm185, %v155, %v202
    %v219 = vsel %vm186, %v158, %v203
    %v220 = vsel %vm187, %v160, %v204
    %v221 = vsel %vm188, %v163, %v205
    %v222 = vsel %vm189, %v165, %v206
    %v223 = vsel %vm190, %v168, %v207
    %v224 = vsel %vm191, %v170, %v208
    %v225 = vsel %vm192, %v173, %v209
    %v226 = vsel %vm193, %v175, %v210
    %v227 = vpack.c.bf16 %v212, %v211
    %v228 = vpack.c.bf16 %v214, %v213
    %v229 = vpack.c.bf16 %v216, %v215
    %v230 = vpack.c.bf16 %v218, %v217
    %v231 = vpack.c.bf16 %v220, %v219
    %v232 = vpack.c.bf16 %v222, %v221
    %v233 = vpack.c.bf16 %v224, %v223
    %v234 = vpack.c.bf16 %v226, %v225
    %v235 = vld [vmem:[%s4] sm:$0xf]
    %v236 = vld [vmem:[%s4 + $0x4] sm:$0xf]
    %v237 = vld [vmem:[%s4 + $0x8] sm:$0xf]
    %v238 = vld [vmem:[%s4 + $0xc] sm:$0xf]
    %v239 = vld [vmem:[%s4 + $0x10] sm:$0xf]
    %v240 = vld [vmem:[%s4 + $0x14] sm:$0xf]
    %v241 = vld [vmem:[%s4 + $0x18] sm:$0xf]
    %v242 = vld [vmem:[%s4 + $0x1c] sm:$0xf]
    %v243 = vld [vmem:[%s4 + $0x20] sm:$0xf]
    %v244 = vld [vmem:[%s4 + $0x24] sm:$0xf]
    %v245 = vld [vmem:[%s4 + $0x28] sm:$0xf]
    %v246 = vld [vmem:[%s4 + $0x2c] sm:$0xf]
    %v247 = vld [vmem:[%s4 + $0x30] sm:$0xf]
    %v248 = vld [vmem:[%s4 + $0x34] sm:$0xf]
    %v249 = vld [vmem:[%s4 + $0x38] sm:$0xf]
    %v250 = vld [vmem:[%s4 + $0x3c] sm:$0xf]
    %v251 = vld [vmem:[%s5] sm:$0x1]
    %v253 = vperm.slane %v251, 0
    %v271 = vunpack.c.l.b16 %v235
    %v272 = vunpack.c.l.b16 %v236
    %v273 = vunpack.c.l.b16 %v237
    %v274 = vunpack.c.l.b16 %v238
    %v275 = vunpack.c.l.b16 %v239
    %v276 = vunpack.c.l.b16 %v240
    %v277 = vunpack.c.l.b16 %v241
    %v278 = vunpack.c.l.b16 %v242
    %v279 = vunpack.c.l.b16 %v243
    %v280 = vunpack.c.l.b16 %v244
    %v281 = vunpack.c.l.b16 %v245
    %v282 = vunpack.c.l.b16 %v246
    %v283 = vunpack.c.l.b16 %v247
    %v284 = vunpack.c.l.b16 %v248
    %v285 = vunpack.c.l.b16 %v249
    %v286 = vunpack.c.l.b16 %v250
    %v287 = vpack.c.b16 %v272, %v271
    %v288 = vpack.c.b16 %v274, %v273
    %v289 = vpack.c.b16 %v276, %v275
    %v290 = vpack.c.b16 %v278, %v277
    %v291 = vpack.c.b16 %v280, %v279
    %v292 = vpack.c.b16 %v282, %v281
    %v293 = vpack.c.b16 %v284, %v283
    %v294 = vpack.c.b16 %v286, %v285
    %303 = vmatpush.bf16.msra.mxu0 %v294
    %304 = vmatpush.bf16.msra.mxu0 %v293
    %305 = vmatpush.bf16.msra.mxu0 %v292
    %306 = vmatpush.bf16.msra.mxu0 %v291
    %307 = vmatpush.bf16.msra.mxu0 %v290
    %308 = vmatpush.bf16.msra.mxu0 %v289
    %309 = vmatpush.bf16.msra.mxu0 %v288
    %310 = vmatpush.bf16.msra.mxu0 %v287
    %311 = vmatmul.bf16.gmra.mxu0 %v227
    %v312 = vpop.f32.mrf.mxu0
    %v313 = vadd.f32 %v253, %v312
    %v314 = vpop.f32.mrf.mxu0
    %v315 = vadd.f32 %v253, %v314
    %316 = vmatmul.bf16.gmra.mxu0 %v228
    %v317 = vpop.f32.mrf.mxu0
    %v318 = vadd.f32 %v253, %v317
    %v319 = vpop.f32.mrf.mxu0
    %v320 = vadd.f32 %v253, %v319
    %321 = vmatmul.bf16.gmra.mxu0 %v229
    %v322 = vpop.f32.mrf.mxu0
    %v323 = vadd.f32 %v253, %v322
    %v324 = vpop.f32.mrf.mxu0
    %v325 = vadd.f32 %v253, %v324
    %326 = vmatmul.bf16.gmra.mxu0 %v230
    %v327 = vpop.f32.mrf.mxu0
    %v328 = vadd.f32 %v253, %v327
    %v329 = vpop.f32.mrf.mxu0
    %v330 = vadd.f32 %v253, %v329
    %331 = vmatmul.bf16.gmra.mxu0 %v231
    %v332 = vpop.f32.mrf.mxu0
    %v333 = vadd.f32 %v253, %v332
    %v334 = vpop.f32.mrf.mxu0
    %v335 = vadd.f32 %v253, %v334
    %336 = vmatmul.bf16.gmra.mxu0 %v232
    %v337 = vpop.f32.mrf.mxu0
    %v338 = vadd.f32 %v253, %v337
    %v339 = vpop.f32.mrf.mxu0
    %v340 = vadd.f32 %v253, %v339
    %341 = vmatmul.bf16.gmra.mxu0 %v233
    %v342 = vpop.f32.mrf.mxu0
    %v343 = vadd.f32 %v253, %v342
    %v344 = vpop.f32.mrf.mxu0
    %v345 = vadd.f32 %v253, %v344
    %346 = vmatmul.bf16.gmra.mxu0 %v234
    %v347 = vpop.f32.mrf.mxu0
    %v348 = vadd.f32 %v253, %v347
    %v349 = vpop.f32.mrf.mxu0
    %v350 = vadd.f32 %v253, %v349
    %351 = vdwg.mxu0
    %352 = vst [vmem:[#allocation5] sm:$0xff] %v313
    %353 = vst [vmem:[#allocation5 + $0x8] sm:$0xff] %v315
    %354 = vst [vmem:[#allocation5 + $0x10] sm:$0xff] %v318
    %355 = vst [vmem:[#allocation5 + $0x18] sm:$0xff] %v320
    %356 = vst [vmem:[#allocation5 + $0x20] sm:$0xff] %v323
    %357 = vst [vmem:[#allocation5 + $0x28] sm:$0xff] %v325
    %358 = vst [vmem:[#allocation5 + $0x30] sm:$0xff] %v328
    %359 = vst [vmem:[#allocation5 + $0x38] sm:$0xff] %v330
    %360 = vst [vmem:[#allocation5 + $0x40] sm:$0xff] %v333
    %361 = vst [vmem:[#allocation5 + $0x48] sm:$0xff] %v335
    %362 = vst [vmem:[#allocation5 + $0x50] sm:$0xff] %v338
    %363 = vst [vmem:[#allocation5 + $0x58] sm:$0xff] %v340
    %364 = vst [vmem:[#allocation5 + $0x60] sm:$0xff] %v343
    %365 = vst [vmem:[#allocation5 + $0x68] sm:$0xff] %v345
    %366 = vst [vmem:[#allocation5 + $0x70] sm:$0xff] %v348
    %367 = vst [vmem:[#allocation5 + $0x78] sm:$0xff] %v350
    // Predicated region
    $region30: #{tpu_custom_call.1} parent=1 // pred_check
      _
    $region31: #{tpu_custom_call.1} parent=1 // pred_check_branch
      %369 = sbr.rel (0) target = $region33
    $region32: #{tpu_custom_call.1} parent=1 // pred_region
      %371 = vsyncadd [#allocation3], 0
      %s372 = sshll.u32 [#allocation5], 4
      %s373 = int_to_ptr.vmem [resolvable:$true] %s372
      %s374 = sshll.u32 %s6, 4
      %s375 = int_to_ptr.hbm [resolvable:$true] %s374
      %380 = dma.vmem_to_hbm [thread:$0]  %s373, 2048, %s375, [#allocation3], 128, 128, 8
    $region33: #{tpu_custom_call.1} parent=1 // pred_fallthru
      _
    // Predicated region
    $region34: #{tpu_custom_call.1} parent=1 // pred_check
      _
    $region35: #{tpu_custom_call.1} parent=1 // pred_check_branch
      %382 = sbr.rel (0) target = $region37
    $region36: #{tpu_custom_call.1} parent=1 // pred_region
      %384 = dma.done [#allocation3], 2048
    $region37: #{tpu_custom_call.1} parent=1 // pred_fallthru
      _
    %385 = vsyncpa [#allocation3], 1
    %386 = vsyncpa [#allocation4], 1

</llo_original>
